<compile_context>
chip_gen: v7x
topology: tpu7x:2x2x1
jax: 0.10.0
libtpu: 0.0.40
codegen_flags: <defaults>
</compile_context>

<pallas_src>
import jax
import jax.numpy as jnp
from jax.experimental import pallas as pl
from jax.experimental.pallas import tpu as pltpu


def _bilstm_last_kernel(x_ref, whh_ref, packed_ref, out_ref):
    # Shapes (H = hidden, T = seq len, O = output size, input_size F == 1):
    #   x_ref      : (T, 1)        float32
    #   whh_ref    : (H, 4H)       bfloat16, forward-direction recurrent weights,
    #                               gate order [i, f, o, g]
    #   packed_ref : (1, 18H + O)  float32 lane-dense row =
    #                  [ wih both dirs (8H) | bias both dirs (8H) | wlin^T (2H) | blin (O) ]
    #   out_ref    : (1, O)        float32  == predictions[-1]
    T = x_ref.shape[0]
    H = whh_ref.shape[0]
    H4 = 4 * H
    O = out_ref.shape[1]

    wih = packed_ref[:, 0:2 * H4]                      # (1, 8H)
    bias = packed_ref[:, 2 * H4:4 * H4]                # (1, 8H)
    wlin_t = packed_ref[:, 4 * H4:4 * H4 + 2 * H]      # (1, 2H)
    blin = packed_ref[:, 4 * H4 + 2 * H:4 * H4 + 2 * H + O]  # (1, O)

    # K=1 input projection for both directions: pure VPU broadcast, no MXU.
    xp = x_ref[...] * wih + bias                       # (T,1)*(1,8H) -> (T, 8H)
    xp_f = xp[:, 0:H4]                                 # (T, 4H) forward projections
    gates_b_last = xp[T - 1:T, H4:2 * H4]              # (1, 4H) only backward row needed

    whh_bf = whh_ref[...]                              # (H, 4H) bf16, loaded once

    def activations(gates):
        # Gate order [i, f, o, g]: one contiguous sigmoid, one tanh (2 EUP pushes).
        sig = jax.nn.sigmoid(gates[:, 0:3 * H])
        i = sig[:, 0:H]
        f = sig[:, H:2 * H]
        o = sig[:, 2 * H:3 * H]
        g = jnp.tanh(gates[:, 3 * H:H4])
        return i, f, o, g

    def step_from_zero(gates):
        # h = c = 0  =>  no recurrent matmul, f-gate term vanishes.
        i, _, o, g = activations(gates)
        c_new = i * g
        return o * jnp.tanh(c_new), c_new

    def step(xp_row, h, c):
        gates = xp_row + jnp.dot(h.astype(jnp.bfloat16), whh_bf,
                                 preferred_element_type=jnp.float32)
        i, f, o, g = activations(gates)
        c_new = f * c + i * g
        return o * jnp.tanh(c_new), c_new

    # Forward recurrence, fully unrolled (static small T); h/c stay in vregs.
    h_f, c_f = step_from_zero(xp_f[0:1, :])
    for t in range(1, T):
        h_f, c_f = step(xp_f[t:t + 1, :], h_f, c_f)

    # Backward direction: only its first step (t = T-1, zero state) contributes
    # to predictions[-1].
    h_b, _ = step_from_zero(gates_b_last)

    # Final linear (O == 1): VPU multiply + XLU lane reduction, no MXU.
    out = (jnp.sum(h_f * wlin_t[:, 0:H], axis=-1, keepdims=True)
           + jnp.sum(h_b * wlin_t[:, H:2 * H], axis=-1, keepdims=True)
           + blin)
    out_ref[...] = out.astype(out_ref.dtype)


def pack_bilstm_params(params):
    """One-time (load-time) repack of PyTorch-layout parameters.

    Reorders gate columns [i, f, g, o] -> [i, f, o, g], folds both directions'
    input weights and biases plus wlin^T and blin into a single lane-dense row,
    drops whh_b (never needed for predictions[-1]), and casts whh_f to bf16
    for single-pass MXU use.  Not on the per-call hot path.
    """
    H = params["whh_f"].shape[0]
    F = params["wih_f"].shape[0]
    O = params["wlin"].shape[1]
    assert F == 1, "kernel packing assumes input_size == 1 (module default)"
    assert O == 1, "kernel final reduction assumes output_size == 1 (module default)"

    perm = jnp.concatenate([jnp.arange(0, 2 * H),
                            jnp.arange(3 * H, 4 * H),
                            jnp.arange(2 * H, 3 * H)])
    reorder = lambda w: jnp.take(w, perm, axis=-1)

    wih_row = jnp.concatenate([reorder(params["wih_f"]),
                               reorder(params["wih_b"])], axis=1)     # (1, 8H)
    b_row = jnp.concatenate([reorder(params["b_f"]),
                             reorder(params["b_b"])], axis=1)         # (1, 8H)
    wlin_t = params["wlin"].T                                          # (O, 2H) = (1, 2H)
    blin = params["blin"]                                              # (1, O)
    packed = jnp.concatenate([wih_row, b_row, wlin_t, blin],
                             axis=1).astype(jnp.float32)               # (1, 18H + O)

    whh_f_bf16 = reorder(params["whh_f"]).astype(jnp.bfloat16)         # (H, 4H)
    return {"whh_f_bf16": whh_f_bf16, "packed": packed, "out_size": O}


def bilstm_forward(x, packed_params):
    """x: (T, 1) float32. Returns predictions[-1] with shape (O,)."""
    whh = packed_params["whh_f_bf16"]
    packed = packed_params["packed"]
    O = packed_params["out_size"]

    vmem = pl.BlockSpec(memory_space=pltpu.MemorySpace.VMEM)
    pred_last = pl.pallas_call(
        _bilstm_last_kernel,
        out_shape=jax.ShapeDtypeStruct((1, O), jnp.float32),
        in_specs=[vmem, vmem, vmem],
        out_specs=vmem,
    )(x, whh, packed)
    return pred_last[0]


def bilstm_reference(x, p):
    """Pure-JAX f32 reference matching PyTorch nn.LSTM(bidirectional=True) +
    Linear, gate order [i, f, g, o], returning predictions[-1]."""
    T, _ = x.shape
    H = p["whh_f"].shape[0]

    def run(time_order, wih, whh, b):
        h = jnp.zeros((H,), jnp.float32)
        c = jnp.zeros((H,), jnp.float32)
        hs = [None] * T
        for t in time_order:
            gates = x[t] @ wih + h @ whh + b[0]
            i = jax.nn.sigmoid(gates[0:H])
            f = jax.nn.sigmoid(gates[H:2 * H])
            g = jnp.tanh(gates[2 * H:3 * H])
            o = jax.nn.sigmoid(gates[3 * H:4 * H])
            c = f * c + i * g
            h = o * jnp.tanh(c)
            hs[t] = h
        return jnp.stack(hs)

    hf = run(range(T), p["wih_f"], p["whh_f"], p["b_f"])
    hb = run(range(T - 1, -1, -1), p["wih_b"], p["whh_b"], p["b_b"])
    out = jnp.concatenate([hf, hb], axis=1) @ p["wlin"] + p["blin"][0]
    return out[-1]


def init_params(key, input_size, hidden, output_size):
    k = 1.0 / jnp.sqrt(jnp.float32(hidden))
    ks = jax.random.split(key, 8)
    u = lambda kk, shape: jax.random.uniform(kk, shape, jnp.float32, -k, k)
    return {
        "wih_f": u(ks[0], (input_size, 4 * hidden)),
        "whh_f": u(ks[1], (hidden, 4 * hidden)),
        "b_f":   u(ks[2], (1, 4 * hidden)),          # b_ih + b_hh combined
        "wih_b": u(ks[3], (input_size, 4 * hidden)),
        "whh_b": u(ks[4], (hidden, 4 * hidden)),
        "b_b":   u(ks[5], (1, 4 * hidden)),
        "wlin":  u(ks[6], (2 * hidden, output_size)),
        "blin":  u(ks[7], (1, output_size)),
    }


if __name__ == "__main__":
    T, INPUT_SIZE, HIDDEN, OUTPUT_SIZE = 8, 1, 32, 1   # small, module-consistent shapes

    key = jax.random.PRNGKey(0)
    kx, kp = jax.random.split(key)
    x = jax.random.normal(kx, (T, INPUT_SIZE), dtype=jnp.float32)
    params = init_params(kp, INPUT_SIZE, HIDDEN, OUTPUT_SIZE)

    packed_params = jax.tree_util.tree_map(jax.block_until_ready,
                                           pack_bilstm_params(params))

    out = jax.block_until_ready(bilstm_forward(x, packed_params))
    ref = jax.block_until_ready(bilstm_reference(x, params))

    assert out.shape == (OUTPUT_SIZE,), out.shape
    # Recurrent matmul uses bf16 operands (f32 accumulate) -> ~1e-2 tolerance.
    assert jnp.allclose(out, ref, atol=2e-2, rtol=2e-2), (out, ref)
    print("KERNEL_OK")
</pallas_src>

<mosaic_0001>
module attributes {stable_mosaic.version = 11 : i64} {
  func.func @_bilstm_last_kernel(%arg0: memref<8x1xf32, #tpu.memory_space<vmem>>, %arg1: memref<32x128xbf16, #tpu.memory_space<vmem>>, %arg2: memref<1x577xf32, #tpu.memory_space<vmem>>, %arg3: memref<1x1xf32, #tpu.memory_space<vmem>>) attributes {dimension_semantics = [], scalar_prefetch = 0 : i64, scratch_operands = 0 : i64, tpu.core_type = #tpu.core_type<tc>} {
    %c0 = arith.constant 0 : index
    %c0_0 = arith.constant 0 : index
    %0 = vector.load %arg2[%c0, %c0_0] : memref<1x577xf32, #tpu.memory_space<vmem>>, vector<1x256xf32>
    %c0_1 = arith.constant 0 : index
    %c256 = arith.constant 256 : index
    %1 = vector.load %arg2[%c0_1, %c256] : memref<1x577xf32, #tpu.memory_space<vmem>>, vector<1x256xf32>
    %c0_2 = arith.constant 0 : index
    %c512 = arith.constant 512 : index
    %2 = vector.load %arg2[%c0_2, %c512] : memref<1x577xf32, #tpu.memory_space<vmem>>, vector<1x64xf32>
    %c0_3 = arith.constant 0 : index
    %c576 = arith.constant 576 : index
    %3 = vector.load %arg2[%c0_3, %c576] : memref<1x577xf32, #tpu.memory_space<vmem>>, vector<1x1xf32>
    %c0_4 = arith.constant 0 : index
    %c0_5 = arith.constant 0 : index
    %4 = vector.load %arg0[%c0_4, %c0_5] : memref<8x1xf32, #tpu.memory_space<vmem>>, vector<8x1xf32>
    %5 = vector.broadcast %4 : vector<8x1xf32> to vector<8x256xf32>
    %6 = vector.broadcast %0 : vector<1x256xf32> to vector<8x256xf32>
    %7 = arith.mulf %5, %6 : vector<8x256xf32>
    %8 = vector.broadcast %1 : vector<1x256xf32> to vector<8x256xf32>
    %9 = arith.addf %7, %8 : vector<8x256xf32>
    %10 = vector.extract_strided_slice %9 {offsets = [0, 0], sizes = [8, 128], strides = [1, 1]} : vector<8x256xf32> to vector<8x128xf32>
    %11 = vector.extract_strided_slice %9 {offsets = [7, 128], sizes = [1, 128], strides = [1, 1]} : vector<8x256xf32> to vector<1x128xf32>
    %c0_6 = arith.constant 0 : index
    %c0_7 = arith.constant 0 : index
    %12 = vector.load %arg1[%c0_6, %c0_7] : memref<32x128xbf16, #tpu.memory_space<vmem>>, vector<32x128xbf16>
    %13 = vector.extract_strided_slice %10 {offsets = [0, 0], sizes = [1, 128], strides = [1, 1]} : vector<8x128xf32> to vector<1x128xf32>
    %14 = vector.extract_strided_slice %13 {offsets = [0, 0], sizes = [1, 96], strides = [1, 1]} : vector<1x128xf32> to vector<1x96xf32>
    %15 = arith.negf %14 : vector<1x96xf32>
    %16 = math.exp %15 : vector<1x96xf32>
    %cst = arith.constant 1.000000e+00 : f32
    %17 = vector.broadcast %cst : f32 to vector<1x96xf32>
    %18 = arith.addf %17, %16 : vector<1x96xf32>
    %19 = arith.divf %17, %18 : vector<1x96xf32>
    %20 = vector.extract_strided_slice %19 {offsets = [0, 0], sizes = [1, 32], strides = [1, 1]} : vector<1x96xf32> to vector<1x32xf32>
    %21 = vector.extract_strided_slice %19 {offsets = [0, 64], sizes = [1, 32], strides = [1, 1]} : vector<1x96xf32> to vector<1x32xf32>
    %22 = vector.extract_strided_slice %13 {offsets = [0, 96], sizes = [1, 32], strides = [1, 1]} : vector<1x128xf32> to vector<1x32xf32>
    %23 = math.tanh %22 : vector<1x32xf32>
    %24 = arith.mulf %20, %23 : vector<1x32xf32>
    %25 = math.tanh %24 : vector<1x32xf32>
    %26 = arith.mulf %21, %25 : vector<1x32xf32>
    %27 = vector.extract_strided_slice %10 {offsets = [1, 0], sizes = [1, 128], strides = [1, 1]} : vector<8x128xf32> to vector<1x128xf32>
    %28 = arith.truncf %26 : vector<1x32xf32> to vector<1x32xbf16>
    %cst_8 = arith.constant dense<0.000000e+00> : vector<1x128xf32>
    %29 = tpu.matmul %28, %12, %cst_8 {dimension_numbers = #tpu.dot_dimension_numbers<[1], [0], [0], [1], [0, 0, 1, 1], [], []>} : vector<1x32xbf16>, vector<32x128xbf16>, vector<1x128xf32> -> vector<1x128xf32>
    %30 = arith.addf %27, %29 : vector<1x128xf32>
    %31 = vector.extract_strided_slice %30 {offsets = [0, 0], sizes = [1, 96], strides = [1, 1]} : vector<1x128xf32> to vector<1x96xf32>
    %32 = arith.negf %31 : vector<1x96xf32>
    %33 = math.exp %32 : vector<1x96xf32>
    %cst_9 = arith.constant 1.000000e+00 : f32
    %34 = vector.broadcast %cst_9 : f32 to vector<1x96xf32>
    %35 = arith.addf %34, %33 : vector<1x96xf32>
    %36 = arith.divf %34, %35 : vector<1x96xf32>
    %37 = vector.extract_strided_slice %36 {offsets = [0, 0], sizes = [1, 32], strides = [1, 1]} : vector<1x96xf32> to vector<1x32xf32>
    %38 = vector.extract_strided_slice %36 {offsets = [0, 32], sizes = [1, 32], strides = [1, 1]} : vector<1x96xf32> to vector<1x32xf32>
    %39 = vector.extract_strided_slice %36 {offsets = [0, 64], sizes = [1, 32], strides = [1, 1]} : vector<1x96xf32> to vector<1x32xf32>
    %40 = vector.extract_strided_slice %30 {offsets = [0, 96], sizes = [1, 32], strides = [1, 1]} : vector<1x128xf32> to vector<1x32xf32>
    %41 = math.tanh %40 : vector<1x32xf32>
    %42 = arith.mulf %38, %24 : vector<1x32xf32>
    %43 = arith.mulf %37, %41 : vector<1x32xf32>
    %44 = arith.addf %42, %43 : vector<1x32xf32>
    %45 = math.tanh %44 : vector<1x32xf32>
    %46 = arith.mulf %39, %45 : vector<1x32xf32>
    %47 = vector.extract_strided_slice %10 {offsets = [2, 0], sizes = [1, 128], strides = [1, 1]} : vector<8x128xf32> to vector<1x128xf32>
    %48 = arith.truncf %46 : vector<1x32xf32> to vector<1x32xbf16>
    %cst_10 = arith.constant dense<0.000000e+00> : vector<1x128xf32>
    %49 = tpu.matmul %48, %12, %cst_10 {dimension_numbers = #tpu.dot_dimension_numbers<[1], [0], [0], [1], [0, 0, 1, 1], [], []>} : vector<1x32xbf16>, vector<32x128xbf16>, vector<1x128xf32> -> vector<1x128xf32>
    %50 = arith.addf %47, %49 : vector<1x128xf32>
    %51 = vector.extract_strided_slice %50 {offsets = [0, 0], sizes = [1, 96], strides = [1, 1]} : vector<1x128xf32> to vector<1x96xf32>
    %52 = arith.negf %51 : vector<1x96xf32>
    %53 = math.exp %52 : vector<1x96xf32>
    %cst_11 = arith.constant 1.000000e+00 : f32
    %54 = vector.broadcast %cst_11 : f32 to vector<1x96xf32>
    %55 = arith.addf %54, %53 : vector<1x96xf32>
    %56 = arith.divf %54, %55 : vector<1x96xf32>
    %57 = vector.extract_strided_slice %56 {offsets = [0, 0], sizes = [1, 32], strides = [1, 1]} : vector<1x96xf32> to vector<1x32xf32>
    %58 = vector.extract_strided_slice %56 {offsets = [0, 32], sizes = [1, 32], strides = [1, 1]} : vector<1x96xf32> to vector<1x32xf32>
    %59 = vector.extract_strided_slice %56 {offsets = [0, 64], sizes = [1, 32], strides = [1, 1]} : vector<1x96xf32> to vector<1x32xf32>
    %60 = vector.extract_strided_slice %50 {offsets = [0, 96], sizes = [1, 32], strides = [1, 1]} : vector<1x128xf32> to vector<1x32xf32>
    %61 = math.tanh %60 : vector<1x32xf32>
    %62 = arith.mulf %58, %44 : vector<1x32xf32>
    %63 = arith.mulf %57, %61 : vector<1x32xf32>
    %64 = arith.addf %62, %63 : vector<1x32xf32>
    %65 = math.tanh %64 : vector<1x32xf32>
    %66 = arith.mulf %59, %65 : vector<1x32xf32>
    %67 = vector.extract_strided_slice %10 {offsets = [3, 0], sizes = [1, 128], strides = [1, 1]} : vector<8x128xf32> to vector<1x128xf32>
    %68 = arith.truncf %66 : vector<1x32xf32> to vector<1x32xbf16>
    %cst_12 = arith.constant dense<0.000000e+00> : vector<1x128xf32>
    %69 = tpu.matmul %68, %12, %cst_12 {dimension_numbers = #tpu.dot_dimension_numbers<[1], [0], [0], [1], [0, 0, 1, 1], [], []>} : vector<1x32xbf16>, vector<32x128xbf16>, vector<1x128xf32> -> vector<1x128xf32>
    %70 = arith.addf %67, %69 : vector<1x128xf32>
    %71 = vector.extract_strided_slice %70 {offsets = [0, 0], sizes = [1, 96], strides = [1, 1]} : vector<1x128xf32> to vector<1x96xf32>
    %72 = arith.negf %71 : vector<1x96xf32>
    %73 = math.exp %72 : vector<1x96xf32>
    %cst_13 = arith.constant 1.000000e+00 : f32
    %74 = vector.broadcast %cst_13 : f32 to vector<1x96xf32>
    %75 = arith.addf %74, %73 : vector<1x96xf32>
    %76 = arith.divf %74, %75 : vector<1x96xf32>
    %77 = vector.extract_strided_slice %76 {offsets = [0, 0], sizes = [1, 32], strides = [1, 1]} : vector<1x96xf32> to vector<1x32xf32>
    %78 = vector.extract_strided_slice %76 {offsets = [0, 32], sizes = [1, 32], strides = [1, 1]} : vector<1x96xf32> to vector<1x32xf32>
    %79 = vector.extract_strided_slice %76 {offsets = [0, 64], sizes = [1, 32], strides = [1, 1]} : vector<1x96xf32> to vector<1x32xf32>
    %80 = vector.extract_strided_slice %70 {offsets = [0, 96], sizes = [1, 32], strides = [1, 1]} : vector<1x128xf32> to vector<1x32xf32>
    %81 = math.tanh %80 : vector<1x32xf32>
    %82 = arith.mulf %78, %64 : vector<1x32xf32>
    %83 = arith.mulf %77, %81 : vector<1x32xf32>
    %84 = arith.addf %82, %83 : vector<1x32xf32>
    %85 = math.tanh %84 : vector<1x32xf32>
    %86 = arith.mulf %79, %85 : vector<1x32xf32>
    %87 = vector.extract_strided_slice %10 {offsets = [4, 0], sizes = [1, 128], strides = [1, 1]} : vector<8x128xf32> to vector<1x128xf32>
    %88 = arith.truncf %86 : vector<1x32xf32> to vector<1x32xbf16>
    %cst_14 = arith.constant dense<0.000000e+00> : vector<1x128xf32>
    %89 = tpu.matmul %88, %12, %cst_14 {dimension_numbers = #tpu.dot_dimension_numbers<[1], [0], [0], [1], [0, 0, 1, 1], [], []>} : vector<1x32xbf16>, vector<32x128xbf16>, vector<1x128xf32> -> vector<1x128xf32>
    %90 = arith.addf %87, %89 : vector<1x128xf32>
    %91 = vector.extract_strided_slice %90 {offsets = [0, 0], sizes = [1, 96], strides = [1, 1]} : vector<1x128xf32> to vector<1x96xf32>
    %92 = arith.negf %91 : vector<1x96xf32>
    %93 = math.exp %92 : vector<1x96xf32>
    %cst_15 = arith.constant 1.000000e+00 : f32
    %94 = vector.broadcast %cst_15 : f32 to vector<1x96xf32>
    %95 = arith.addf %94, %93 : vector<1x96xf32>
    %96 = arith.divf %94, %95 : vector<1x96xf32>
    %97 = vector.extract_strided_slice %96 {offsets = [0, 0], sizes = [1, 32], strides = [1, 1]} : vector<1x96xf32> to vector<1x32xf32>
    %98 = vector.extract_strided_slice %96 {offsets = [0, 32], sizes = [1, 32], strides = [1, 1]} : vector<1x96xf32> to vector<1x32xf32>
    %99 = vector.extract_strided_slice %96 {offsets = [0, 64], sizes = [1, 32], strides = [1, 1]} : vector<1x96xf32> to vector<1x32xf32>
    %100 = vector.extract_strided_slice %90 {offsets = [0, 96], sizes = [1, 32], strides = [1, 1]} : vector<1x128xf32> to vector<1x32xf32>
    %101 = math.tanh %100 : vector<1x32xf32>
    %102 = arith.mulf %98, %84 : vector<1x32xf32>
    %103 = arith.mulf %97, %101 : vector<1x32xf32>
    %104 = arith.addf %102, %103 : vector<1x32xf32>
    %105 = math.tanh %104 : vector<1x32xf32>
    %106 = arith.mulf %99, %105 : vector<1x32xf32>
    %107 = vector.extract_strided_slice %10 {offsets = [5, 0], sizes = [1, 128], strides = [1, 1]} : vector<8x128xf32> to vector<1x128xf32>
    %108 = arith.truncf %106 : vector<1x32xf32> to vector<1x32xbf16>
    %cst_16 = arith.constant dense<0.000000e+00> : vector<1x128xf32>
    %109 = tpu.matmul %108, %12, %cst_16 {dimension_numbers = #tpu.dot_dimension_numbers<[1], [0], [0], [1], [0, 0, 1, 1], [], []>} : vector<1x32xbf16>, vector<32x128xbf16>, vector<1x128xf32> -> vector<1x128xf32>
    %110 = arith.addf %107, %109 : vector<1x128xf32>
    %111 = vector.extract_strided_slice %110 {offsets = [0, 0], sizes = [1, 96], strides = [1, 1]} : vector<1x128xf32> to vector<1x96xf32>
    %112 = arith.negf %111 : vector<1x96xf32>
    %113 = math.exp %112 : vector<1x96xf32>
    %cst_17 = arith.constant 1.000000e+00 : f32
    %114 = vector.broadcast %cst_17 : f32 to vector<1x96xf32>
    %115 = arith.addf %114, %113 : vector<1x96xf32>
    %116 = arith.divf %114, %115 : vector<1x96xf32>
    %117 = vector.extract_strided_slice %116 {offsets = [0, 0], sizes = [1, 32], strides = [1, 1]} : vector<1x96xf32> to vector<1x32xf32>
    %118 = vector.extract_strided_slice %116 {offsets = [0, 32], sizes = [1, 32], strides = [1, 1]} : vector<1x96xf32> to vector<1x32xf32>
    %119 = vector.extract_strided_slice %116 {offsets = [0, 64], sizes = [1, 32], strides = [1, 1]} : vector<1x96xf32> to vector<1x32xf32>
    %120 = vector.extract_strided_slice %110 {offsets = [0, 96], sizes = [1, 32], strides = [1, 1]} : vector<1x128xf32> to vector<1x32xf32>
    %121 = math.tanh %120 : vector<1x32xf32>
    %122 = arith.mulf %118, %104 : vector<1x32xf32>
    %123 = arith.mulf %117, %121 : vector<1x32xf32>
    %124 = arith.addf %122, %123 : vector<1x32xf32>
    %125 = math.tanh %124 : vector<1x32xf32>
    %126 = arith.mulf %119, %125 : vector<1x32xf32>
    %127 = vector.extract_strided_slice %10 {offsets = [6, 0], sizes = [1, 128], strides = [1, 1]} : vector<8x128xf32> to vector<1x128xf32>
    %128 = arith.truncf %126 : vector<1x32xf32> to vector<1x32xbf16>
    %cst_18 = arith.constant dense<0.000000e+00> : vector<1x128xf32>
    %129 = tpu.matmul %128, %12, %cst_18 {dimension_numbers = #tpu.dot_dimension_numbers<[1], [0], [0], [1], [0, 0, 1, 1], [], []>} : vector<1x32xbf16>, vector<32x128xbf16>, vector<1x128xf32> -> vector<1x128xf32>
    %130 = arith.addf %127, %129 : vector<1x128xf32>
    %131 = vector.extract_strided_slice %130 {offsets = [0, 0], sizes = [1, 96], strides = [1, 1]} : vector<1x128xf32> to vector<1x96xf32>
    %132 = arith.negf %131 : vector<1x96xf32>
    %133 = math.exp %132 : vector<1x96xf32>
    %cst_19 = arith.constant 1.000000e+00 : f32
    %134 = vector.broadcast %cst_19 : f32 to vector<1x96xf32>
    %135 = arith.addf %134, %133 : vector<1x96xf32>
    %136 = arith.divf %134, %135 : vector<1x96xf32>
    %137 = vector.extract_strided_slice %136 {offsets = [0, 0], sizes = [1, 32], strides = [1, 1]} : vector<1x96xf32> to vector<1x32xf32>
    %138 = vector.extract_strided_slice %136 {offsets = [0, 32], sizes = [1, 32], strides = [1, 1]} : vector<1x96xf32> to vector<1x32xf32>
    %139 = vector.extract_strided_slice %136 {offsets = [0, 64], sizes = [1, 32], strides = [1, 1]} : vector<1x96xf32> to vector<1x32xf32>
    %140 = vector.extract_strided_slice %130 {offsets = [0, 96], sizes = [1, 32], strides = [1, 1]} : vector<1x128xf32> to vector<1x32xf32>
    %141 = math.tanh %140 : vector<1x32xf32>
    %142 = arith.mulf %138, %124 : vector<1x32xf32>
    %143 = arith.mulf %137, %141 : vector<1x32xf32>
    %144 = arith.addf %142, %143 : vector<1x32xf32>
    %145 = math.tanh %144 : vector<1x32xf32>
    %146 = arith.mulf %139, %145 : vector<1x32xf32>
    %147 = vector.extract_strided_slice %10 {offsets = [7, 0], sizes = [1, 128], strides = [1, 1]} : vector<8x128xf32> to vector<1x128xf32>
    %148 = arith.truncf %146 : vector<1x32xf32> to vector<1x32xbf16>
    %cst_20 = arith.constant dense<0.000000e+00> : vector<1x128xf32>
    %149 = tpu.matmul %148, %12, %cst_20 {dimension_numbers = #tpu.dot_dimension_numbers<[1], [0], [0], [1], [0, 0, 1, 1], [], []>} : vector<1x32xbf16>, vector<32x128xbf16>, vector<1x128xf32> -> vector<1x128xf32>
    %150 = arith.addf %147, %149 : vector<1x128xf32>
    %151 = vector.extract_strided_slice %150 {offsets = [0, 0], sizes = [1, 96], strides = [1, 1]} : vector<1x128xf32> to vector<1x96xf32>
    %152 = arith.negf %151 : vector<1x96xf32>
    %153 = math.exp %152 : vector<1x96xf32>
    %cst_21 = arith.constant 1.000000e+00 : f32
    %154 = vector.broadcast %cst_21 : f32 to vector<1x96xf32>
    %155 = arith.addf %154, %153 : vector<1x96xf32>
    %156 = arith.divf %154, %155 : vector<1x96xf32>
    %157 = vector.extract_strided_slice %156 {offsets = [0, 0], sizes = [1, 32], strides = [1, 1]} : vector<1x96xf32> to vector<1x32xf32>
    %158 = vector.extract_strided_slice %156 {offsets = [0, 32], sizes = [1, 32], strides = [1, 1]} : vector<1x96xf32> to vector<1x32xf32>
    %159 = vector.extract_strided_slice %156 {offsets = [0, 64], sizes = [1, 32], strides = [1, 1]} : vector<1x96xf32> to vector<1x32xf32>
    %160 = vector.extract_strided_slice %150 {offsets = [0, 96], sizes = [1, 32], strides = [1, 1]} : vector<1x128xf32> to vector<1x32xf32>
    %161 = math.tanh %160 : vector<1x32xf32>
    %162 = arith.mulf %158, %144 : vector<1x32xf32>
    %163 = arith.mulf %157, %161 : vector<1x32xf32>
    %164 = arith.addf %162, %163 : vector<1x32xf32>
    %165 = math.tanh %164 : vector<1x32xf32>
    %166 = arith.mulf %159, %165 : vector<1x32xf32>
    %167 = vector.extract_strided_slice %11 {offsets = [0, 0], sizes = [1, 96], strides = [1, 1]} : vector<1x128xf32> to vector<1x96xf32>
    %168 = arith.negf %167 : vector<1x96xf32>
    %169 = math.exp %168 : vector<1x96xf32>
    %cst_22 = arith.constant 1.000000e+00 : f32
    %170 = vector.broadcast %cst_22 : f32 to vector<1x96xf32>
    %171 = arith.addf %170, %169 : vector<1x96xf32>
    %172 = arith.divf %170, %171 : vector<1x96xf32>
    %173 = vector.extract_strided_slice %172 {offsets = [0, 0], sizes = [1, 32], strides = [1, 1]} : vector<1x96xf32> to vector<1x32xf32>
    %174 = vector.extract_strided_slice %172 {offsets = [0, 64], sizes = [1, 32], strides = [1, 1]} : vector<1x96xf32> to vector<1x32xf32>
    %175 = vector.extract_strided_slice %11 {offsets = [0, 96], sizes = [1, 32], strides = [1, 1]} : vector<1x128xf32> to vector<1x32xf32>
    %176 = math.tanh %175 : vector<1x32xf32>
    %177 = arith.mulf %173, %176 : vector<1x32xf32>
    %178 = math.tanh %177 : vector<1x32xf32>
    %179 = arith.mulf %174, %178 : vector<1x32xf32>
    %180 = vector.extract_strided_slice %2 {offsets = [0, 0], sizes = [1, 32], strides = [1, 1]} : vector<1x64xf32> to vector<1x32xf32>
    %181 = arith.mulf %166, %180 : vector<1x32xf32>
    %cst_23 = arith.constant dense<0.000000e+00> : vector<1xf32>
    %182 = vector.multi_reduction <add>, %181, %cst_23 [1] : vector<1x32xf32> to vector<1xf32>
    %183 = vector.shape_cast %182 : vector<1xf32> to vector<1x1xf32>
    %184 = vector.extract_strided_slice %2 {offsets = [0, 32], sizes = [1, 32], strides = [1, 1]} : vector<1x64xf32> to vector<1x32xf32>
    %185 = arith.mulf %179, %184 : vector<1x32xf32>
    %cst_24 = arith.constant dense<0.000000e+00> : vector<1xf32>
    %186 = vector.multi_reduction <add>, %185, %cst_24 [1] : vector<1x32xf32> to vector<1xf32>
    %187 = vector.shape_cast %186 : vector<1xf32> to vector<1x1xf32>
    %188 = arith.addf %183, %187 : vector<1x1xf32>
    %189 = arith.addf %188, %3 : vector<1x1xf32>
    %c0_25 = arith.constant 0 : index
    %c0_26 = arith.constant 0 : index
    %190 = vector.load %arg3[%c0_25, %c0_26] : memref<1x1xf32, #tpu.memory_space<vmem>>, vector<1x1xf32>
    tpu.vector_store %arg3[%c0_25, %c0_26], %189 {strides = array<i32>} : memref<1x1xf32, #tpu.memory_space<vmem>>, vector<1x1xf32>,
    return
  }
}

</mosaic_0001>

<llo_original>
// kernel: tpu_custom_call.1
$region0: #{tpu_custom_call.1}
  #allocation0 [shape = 'u32[]', space=smem, size = 0x4, offset = 0x4, fixed_abs, tag = 'smem constant byte address 0x4 - core index']
  #allocation1 [shape = 'u32[144,128]{1,0:T(1,128)}', space=vmem, size = 0x12000, scoped, tag = 'internal scratch']
  %s0 = inlined_call_operand.vmem [shape: f32[8,1], index: 0, kind: input, shape index: {}]
  %s1 = inlined_call_operand.hbm [shape: bf16[32,128], index: 1, kind: input, shape index: {}]
  %s2 = inlined_call_operand.vmem [shape: f32[1,577], index: 2, kind: input, shape index: {}]
  %s3 = inlined_call_operand.hbm [shape: f32[1,1], index: 3, kind: output, shape index: {}]
  %s4 = sld [smem:[#allocation0]]
  $region26: #{tpu_custom_call.1} parent=0
    _
  %s6 = ssub.s32 1, %s4
  %s7 = scalar_select 0, %s6, %s4
  $region1: #{tpu_custom_call.1} parent=0
    #allocation2 [shape = 'u8[8192]{0}', space=vmem, size = 0x2000, scoped, tag = 'input window, operand 1, single buffered']
    #allocation3 [shape = 's32[1]{0}', space=sflag, size = 0x4, scoped, tag = 'scoped memory for tpu_custom_call.1']
    #allocation4 [shape = 's32[1]{0}', space=sflag, size = 0x4, scoped, tag = 'scoped memory for tpu_custom_call.1']
    #allocation5 [shape = 'u8[512]{0}', space=vmem, size = 0x400, scoped, tag = 'output window, operand 0, single buffered']
    %8 = vsyncpa [#allocation3], 0
    %9 = vsyncpa [#allocation4], 0
    // Predicated region
    $region2: #{tpu_custom_call.1} parent=1 // pred_check
      _
    $region3: #{tpu_custom_call.1} parent=1 // pred_check_branch
      %11 = sbr.rel (0) target = $region5
    $region4: #{tpu_custom_call.1} parent=1 // pred_region
      _
    $region5: #{tpu_custom_call.1} parent=1 // pred_fallthru
      _
    // Predicated region
    $region6: #{tpu_custom_call.1} parent=1 // pred_check
      _
    $region7: #{tpu_custom_call.1} parent=1 // pred_check_branch
      %13 = sbr.rel (0) target = $region9
    $region8: #{tpu_custom_call.1} parent=1 // pred_region
      %s15 = ssub.s32 256, 256
      %16 = vsyncadd [#allocation3], %s15
      %s17 = sshll.u32 [#allocation2], 4
      %s18 = int_to_ptr.vmem [resolvable:$true] %s17
      %23 = dma.hbm_to_vmem [thread:$0]  %s1, 256, %s18, [#allocation3], 64, 64, 4
    $region9: #{tpu_custom_call.1} parent=1 // pred_fallthru
      _
    // Predicated region
    $region10: #{tpu_custom_call.1} parent=1 // pred_check
      _
    $region11: #{tpu_custom_call.1} parent=1 // pred_check_branch
      %25 = sbr.rel (0) target = $region13
    $region12: #{tpu_custom_call.1} parent=1 // pred_region
      _
    $region13: #{tpu_custom_call.1} parent=1 // pred_fallthru
      _
    // Predicated region
    $region14: #{tpu_custom_call.1} parent=1 // pred_check
      _
    $region15: #{tpu_custom_call.1} parent=1 // pred_check_branch
      %27 = sbr.rel (0) target = $region17
    $region16: #{tpu_custom_call.1} parent=1 // pred_region
      %28 = dma.done [#allocation3], 256
    $region17: #{tpu_custom_call.1} parent=1 // pred_fallthru
      _
    %v30 = vld [vmem:[%s2] sm:$0x3]
    %v31 = vld [vmem:[%s2 + $0x2] sm:$0x3]
    %v32 = vld [vmem:[%s2 + $0x4] sm:$0x1]
    %v33 = vld [vmem:[%s0] sm:$0xff]
    %35 = vset.pattern.permute.xlu0 0
    %36 = vperm.xlu0 %35, %v33
    %v37 = vpop.permute.xlu0 %36
    %v40 = vlaneseq
    %v41 = vshrl.u32 %v40, 7
    %v42 = vsub.s32 0, %v41
    %v43 = vrot.slane %v30, %v42
    %v44 = vlaneseq
    %v45 = vshrl.u32 %v44, 7
    %v46 = vsub.s32 1, %v45
    %v47 = vrot.slane %v30, %v46
    %v50 = vmul.f32 %v37, %v43
    %v51 = vmul.f32 %v37, %v47
    %v53 = vlaneseq
    %v54 = vshrl.u32 %v53, 7
    %v55 = vsub.s32 0, %v54
    %v56 = vrot.slane %v31, %v55
    %v57 = vlaneseq
    %v58 = vshrl.u32 %v57, 7
    %v59 = vsub.s32 1, %v58
    %v60 = vrot.slane %v31, %v59
    %v63 = vadd.f32 %v50, %v56
    %v64 = vadd.f32 %v51, %v60
    %v65 = vld [vmem:[#allocation2] sm:$0xf]
    %v66 = vld [vmem:[#allocation2 + $0x4] sm:$0xf]
    %v67 = vld [vmem:[#allocation2 + $0x8] sm:$0xf]
    %v68 = vld [vmem:[#allocation2 + $0xc] sm:$0xf]
    %v69 = vxor.u32 %v63, 2147483648
    %v70 = vmul.f32 %v69, 1.442695
    %v71 = vpow.pop %v70
    %v72 = vadd.f32 %v71, 1.0
    %v73 = vrcp.pop %v72
    %v74 = vmul.f32 1.0, %v73
    %v75 = vtanh.pop %v63
    %77 = vrot.lane.b32.xlu0 %v75, 32
    %v78 = vpop.permute.xlu0 %77
    %v80 = vmul.f32 %v74, %v78
    %v81 = vtanh.pop %v80
    %83 = vrot.lane.b32.xlu0 %v81, 64
    %v84 = vpop.permute.xlu0 %83
    %v86 = vmul.f32 %v74, %v84
    %v87 = vpack.c.bf16 %v86, %v86
    %89 = vrot.lane.b32.xlu0 %v87, 64
    %v90 = vpop.permute.xlu0 %89
    %v95 = vunpack.c.l.b16 %v65
    %v96 = vunpack.c.l.b16 %v66
    %v97 = vunpack.c.l.b16 %v67
    %v98 = vunpack.c.l.b16 %v68
    %v99 = vpack.c.b16 %v96, %v95
    %v100 = vpack.c.b16 %v98, %v97
    %vm103 = vcmask 261120
    %v105 = vsel %vm103, %v90, 0
    %107 = vmatprep.subr.bf16.mxu0 0
    %108 = vmatpush1.bf16.msra.mxu0 %v99
    %109 = vmatprep.subr.bf16.mxu0 0
    %110 = vmatpush1.bf16.msra.mxu0 %v100
    %111 = vmatprep.subr.bf16.mxu0 0
    %112 = vmatpush1.bf16.msra.mxu0 0
    %113 = vmatprep.subr.bf16.mxu0 0
    %114 = vmatpush1.bf16.msra.mxu0 0
    %115 = vmatprep.subr.bf16.mxu0 0
    %116 = vmatpush1.bf16.msra.mxu0 0
    %117 = vmatprep.subr.bf16.mxu0 0
    %118 = vmatpush1.bf16.msra.mxu0 0
    %119 = vmatprep.subr.bf16.mxu0 0
    %120 = vmatpush1.bf16.msra.mxu0 0
    %121 = vmatprep.subr.bf16.mxu0 0
    %122 = vmatpush1.bf16.msra.mxu0 0
    %123 = vmatprep.subr.bf16.mxu0 0
    %124 = vmatpush1.bf16.msra.mxu0 0
    %125 = vmatprep.subr.bf16.mxu0 0
    %126 = vmatpush1.bf16.msra.mxu0 0
    %127 = vmatprep.subr.bf16.mxu0 0
    %128 = vmatpush1.bf16.msra.mxu0 0
    %129 = vmatprep.subr.bf16.mxu0 0
    %130 = vmatpush1.bf16.msra.mxu0 0
    %131 = vmatprep.subr.bf16.mxu0 0
    %132 = vmatpush1.bf16.msra.mxu0 0
    %133 = vmatprep.subr.bf16.mxu0 0
    %134 = vmatpush1.bf16.msra.mxu0 0
    %135 = vmatprep.subr.bf16.mxu0 0
    %136 = vmatpush1.bf16.msra.mxu0 0
    %137 = vmatprep.subr.bf16.mxu0 0
    %138 = vmatpush1.bf16.msra.mxu0 0
    %139 = vmatprep.mubr.bf16.mxu0 0
    %140 = vmatmul.mubr.bf16.gmra.mrb[0].mxu0 %v105
    %v141 = vpop.f32.mrb[0].mxu0
    %v142 = vadd.f32 0.0, %v141
    %v143 = vpop.f32.mrb[0].mxu0
    %v144 = vpop.f32.mrb[0].mxu0
    %v145 = vpop.f32.mrb[0].mxu0
    %146 = vdwg.mxu0
    %v148 = vrot.slane %v142, 7
    %v150 = vadd.f32 %v63, %v148
    %v151 = vxor.u32 %v150, 2147483648
    %v152 = vmul.f32 %v151, 1.442695
    %v153 = vpow.pop %v152
    %v154 = vadd.f32 %v153, 1.0
    %v155 = vrcp.pop %v154
    %v156 = vmul.f32 1.0, %v155
    %v157 = vtanh.pop %v150
    %v159 = vrot.slane %v80, 7
    %160 = vrot.lane.b32.xlu0 %v159, 32
    %v161 = vpop.permute.xlu0 %160
    %v163 = vmul.f32 %v156, %v161
    %165 = vrot.lane.b32.xlu0 %v157, 32
    %v166 = vpop.permute.xlu0 %165
    %v168 = vmul.f32 %v156, %v166
    %170 = vrot.lane.b32.xlu0 %v168, 32
    %v171 = vpop.permute.xlu0 %170
    %v173 = vadd.f32 %v163, %v171
    %v174 = vtanh.pop %v173
    %176 = vrot.lane.b32.xlu0 %v174, 32
    %v177 = vpop.permute.xlu0 %176
    %v179 = vmul.f32 %v156, %v177
    %v180 = vpack.c.bf16 %v179, %v179
    %v182 = vshrl.u32 %v180, 16
    %184 = vrot.lane.b32.xlu0 %v182, 64
    %v185 = vpop.permute.xlu0 %184
    %v187 = vsel %vm103, %v185, 0
    %189 = vmatprep.subr.bf16.mxu0 0
    %190 = vmatpush1.bf16.msra.mxu0 %v99
    %191 = vmatprep.subr.bf16.mxu0 0
    %192 = vmatpush1.bf16.msra.mxu0 %v100
    %193 = vmatprep.subr.bf16.mxu0 0
    %194 = vmatpush1.bf16.msra.mxu0 0
    %195 = vmatprep.subr.bf16.mxu0 0
    %196 = vmatpush1.bf16.msra.mxu0 0
    %197 = vmatprep.subr.bf16.mxu0 0
    %198 = vmatpush1.bf16.msra.mxu0 0
    %199 = vmatprep.subr.bf16.mxu0 0
    %200 = vmatpush1.bf16.msra.mxu0 0
    %201 = vmatprep.subr.bf16.mxu0 0
    %202 = vmatpush1.bf16.msra.mxu0 0
    %203 = vmatprep.subr.bf16.mxu0 0
    %204 = vmatpush1.bf16.msra.mxu0 0
    %205 = vmatprep.subr.bf16.mxu0 0
    %206 = vmatpush1.bf16.msra.mxu0 0
    %207 = vmatprep.subr.bf16.mxu0 0
    %208 = vmatpush1.bf16.msra.mxu0 0
    %209 = vmatprep.subr.bf16.mxu0 0
    %210 = vmatpush1.bf16.msra.mxu0 0
    %211 = vmatprep.subr.bf16.mxu0 0
    %212 = vmatpush1.bf16.msra.mxu0 0
    %213 = vmatprep.subr.bf16.mxu0 0
    %214 = vmatpush1.bf16.msra.mxu0 0
    %215 = vmatprep.subr.bf16.mxu0 0
    %216 = vmatpush1.bf16.msra.mxu0 0
    %217 = vmatprep.subr.bf16.mxu0 0
    %218 = vmatpush1.bf16.msra.mxu0 0
    %219 = vmatprep.subr.bf16.mxu0 0
    %220 = vmatpush1.bf16.msra.mxu0 0
    %221 = vmatprep.mubr.bf16.mxu0 0
    %222 = vmatmul.mubr.bf16.gmra.mrb[0].mxu0 %v187
    %v223 = vpop.f32.mrb[0].mxu0
    %v224 = vadd.f32 0.0, %v223
    %v225 = vpop.f32.mrb[0].mxu0
    %v226 = vpop.f32.mrb[0].mxu0
    %v227 = vpop.f32.mrb[0].mxu0
    %228 = vdwg.mxu0
    %v230 = vrot.slane %v224, 6
    %v232 = vadd.f32 %v63, %v230
    %v233 = vxor.u32 %v232, 2147483648
    %v234 = vmul.f32 %v233, 1.442695
    %v235 = vpow.pop %v234
    %v236 = vadd.f32 %v235, 1.0
    %v237 = vrcp.pop %v236
    %v238 = vmul.f32 1.0, %v237
    %v239 = vtanh.pop %v232
    %v241 = vrot.slane %v173, 7
    %v243 = vmul.f32 %v238, %v241
    %245 = vrot.lane.b32.xlu0 %v239, 32
    %v246 = vpop.permute.xlu0 %245
    %v248 = vmul.f32 %v238, %v246
    %250 = vrot.lane.b32.xlu0 %v248, 32
    %v251 = vpop.permute.xlu0 %250
    %v253 = vadd.f32 %v243, %v251
    %v254 = vtanh.pop %v253
    %256 = vrot.lane.b32.xlu0 %v254, 32
    %v257 = vpop.permute.xlu0 %256
    %v259 = vmul.f32 %v238, %v257
    %v260 = vpack.c.bf16 %v259, %v259
    %v262 = vrot.slane %v260, 1
    %263 = vrot.lane.b32.xlu0 %v262, 64
    %v264 = vpop.permute.xlu0 %263
    %v266 = vsel %vm103, %v264, 0
    %268 = vmatprep.subr.bf16.mxu0 0
    %269 = vmatpush1.bf16.msra.mxu0 %v99
    %270 = vmatprep.subr.bf16.mxu0 0
    %271 = vmatpush1.bf16.msra.mxu0 %v100
    %272 = vmatprep.subr.bf16.mxu0 0
    %273 = vmatpush1.bf16.msra.mxu0 0
    %274 = vmatprep.subr.bf16.mxu0 0
    %275 = vmatpush1.bf16.msra.mxu0 0
    %276 = vmatprep.subr.bf16.mxu0 0
    %277 = vmatpush1.bf16.msra.mxu0 0
    %278 = vmatprep.subr.bf16.mxu0 0
    %279 = vmatpush1.bf16.msra.mxu0 0
    %280 = vmatprep.subr.bf16.mxu0 0
    %281 = vmatpush1.bf16.msra.mxu0 0
    %282 = vmatprep.subr.bf16.mxu0 0
    %283 = vmatpush1.bf16.msra.mxu0 0
    %284 = vmatprep.subr.bf16.mxu0 0
    %285 = vmatpush1.bf16.msra.mxu0 0
    %286 = vmatprep.subr.bf16.mxu0 0
    %287 = vmatpush1.bf16.msra.mxu0 0
    %288 = vmatprep.subr.bf16.mxu0 0
    %289 = vmatpush1.bf16.msra.mxu0 0
    %290 = vmatprep.subr.bf16.mxu0 0
    %291 = vmatpush1.bf16.msra.mxu0 0
    %292 = vmatprep.subr.bf16.mxu0 0
    %293 = vmatpush1.bf16.msra.mxu0 0
    %294 = vmatprep.subr.bf16.mxu0 0
    %295 = vmatpush1.bf16.msra.mxu0 0
    %296 = vmatprep.subr.bf16.mxu0 0
    %297 = vmatpush1.bf16.msra.mxu0 0
    %298 = vmatprep.subr.bf16.mxu0 0
    %299 = vmatpush1.bf16.msra.mxu0 0
    %300 = vmatprep.mubr.bf16.mxu0 0
    %301 = vmatmul.mubr.bf16.gmra.mrb[0].mxu0 %v266
    %v302 = vpop.f32.mrb[0].mxu0
    %v303 = vadd.f32 0.0, %v302
    %v304 = vpop.f32.mrb[0].mxu0
    %v305 = vpop.f32.mrb[0].mxu0
    %v306 = vpop.f32.mrb[0].mxu0
    %307 = vdwg.mxu0
    %v309 = vrot.slane %v303, 5
    %v311 = vadd.f32 %v63, %v309
    %v312 = vxor.u32 %v311, 2147483648
    %v313 = vmul.f32 %v312, 1.442695
    %v314 = vpow.pop %v313
    %v315 = vadd.f32 %v314, 1.0
    %v316 = vrcp.pop %v315
    %v317 = vmul.f32 1.0, %v316
    %v318 = vtanh.pop %v311
    %v320 = vrot.slane %v253, 7
    %v322 = vmul.f32 %v317, %v320
    %324 = vrot.lane.b32.xlu0 %v318, 32
    %v325 = vpop.permute.xlu0 %324
    %v327 = vmul.f32 %v317, %v325
    %329 = vrot.lane.b32.xlu0 %v327, 32
    %v330 = vpop.permute.xlu0 %329
    %v332 = vadd.f32 %v322, %v330
    %v333 = vtanh.pop %v332
    %335 = vrot.lane.b32.xlu0 %v333, 32
    %v336 = vpop.permute.xlu0 %335
    %v338 = vmul.f32 %v317, %v336
    %v339 = vpack.c.bf16 %v338, %v338
    %v341 = vshrl.u32 %v339, 16
    %v343 = vrot.slane %v341, 1
    %344 = vrot.lane.b32.xlu0 %v343, 64
    %v345 = vpop.permute.xlu0 %344
    %v347 = vsel %vm103, %v345, 0
    %349 = vmatprep.subr.bf16.mxu0 0
    %350 = vmatpush1.bf16.msra.mxu0 %v99
    %351 = vmatprep.subr.bf16.mxu0 0
    %352 = vmatpush1.bf16.msra.mxu0 %v100
    %353 = vmatprep.subr.bf16.mxu0 0
    %354 = vmatpush1.bf16.msra.mxu0 0
    %355 = vmatprep.subr.bf16.mxu0 0
    %356 = vmatpush1.bf16.msra.mxu0 0
    %357 = vmatprep.subr.bf16.mxu0 0
    %358 = vmatpush1.bf16.msra.mxu0 0
    %359 = vmatprep.subr.bf16.mxu0 0
    %360 = vmatpush1.bf16.msra.mxu0 0
    %361 = vmatprep.subr.bf16.mxu0 0
    %362 = vmatpush1.bf16.msra.mxu0 0
    %363 = vmatprep.subr.bf16.mxu0 0
    %364 = vmatpush1.bf16.msra.mxu0 0
    %365 = vmatprep.subr.bf16.mxu0 0
    %366 = vmatpush1.bf16.msra.mxu0 0
    %367 = vmatprep.subr.bf16.mxu0 0
    %368 = vmatpush1.bf16.msra.mxu0 0
    %369 = vmatprep.subr.bf16.mxu0 0
    %370 = vmatpush1.bf16.msra.mxu0 0
    %371 = vmatprep.subr.bf16.mxu0 0
    %372 = vmatpush1.bf16.msra.mxu0 0
    %373 = vmatprep.subr.bf16.mxu0 0
    %374 = vmatpush1.bf16.msra.mxu0 0
    %375 = vmatprep.subr.bf16.mxu0 0
    %376 = vmatpush1.bf16.msra.mxu0 0
    %377 = vmatprep.subr.bf16.mxu0 0
    %378 = vmatpush1.bf16.msra.mxu0 0
    %379 = vmatprep.subr.bf16.mxu0 0
    %380 = vmatpush1.bf16.msra.mxu0 0
    %381 = vmatprep.mubr.bf16.mxu0 0
    %382 = vmatmul.mubr.bf16.gmra.mrb[0].mxu0 %v347
    %v383 = vpop.f32.mrb[0].mxu0
    %v384 = vadd.f32 0.0, %v383
    %v385 = vpop.f32.mrb[0].mxu0
    %v386 = vpop.f32.mrb[0].mxu0
    %v387 = vpop.f32.mrb[0].mxu0
    %388 = vdwg.mxu0
    %v390 = vrot.slane %v384, 4
    %v392 = vadd.f32 %v63, %v390
    %v393 = vxor.u32 %v392, 2147483648
    %v394 = vmul.f32 %v393, 1.442695
    %v395 = vpow.pop %v394
    %v396 = vadd.f32 %v395, 1.0
    %v397 = vrcp.pop %v396
    %v398 = vmul.f32 1.0, %v397
    %v399 = vtanh.pop %v392
    %v401 = vrot.slane %v332, 7
    %v403 = vmul.f32 %v398, %v401
    %405 = vrot.lane.b32.xlu0 %v399, 32
    %v406 = vpop.permute.xlu0 %405
    %v408 = vmul.f32 %v398, %v406
    %410 = vrot.lane.b32.xlu0 %v408, 32
    %v411 = vpop.permute.xlu0 %410
    %v413 = vadd.f32 %v403, %v411
    %v414 = vtanh.pop %v413
    %416 = vrot.lane.b32.xlu0 %v414, 32
    %v417 = vpop.permute.xlu0 %416
    %v419 = vmul.f32 %v398, %v417
    %v420 = vpack.c.bf16 %v419, %v419
    %v422 = vrot.slane %v420, 2
    %423 = vrot.lane.b32.xlu0 %v422, 64
    %v424 = vpop.permute.xlu0 %423
    %v426 = vsel %vm103, %v424, 0
    %428 = vmatprep.subr.bf16.mxu0 0
    %429 = vmatpush1.bf16.msra.mxu0 %v99
    %430 = vmatprep.subr.bf16.mxu0 0
    %431 = vmatpush1.bf16.msra.mxu0 %v100
    %432 = vmatprep.subr.bf16.mxu0 0
    %433 = vmatpush1.bf16.msra.mxu0 0
    %434 = vmatprep.subr.bf16.mxu0 0
    %435 = vmatpush1.bf16.msra.mxu0 0
    %436 = vmatprep.subr.bf16.mxu0 0
    %437 = vmatpush1.bf16.msra.mxu0 0
    %438 = vmatprep.subr.bf16.mxu0 0
    %439 = vmatpush1.bf16.msra.mxu0 0
    %440 = vmatprep.subr.bf16.mxu0 0
    %441 = vmatpush1.bf16.msra.mxu0 0
    %442 = vmatprep.subr.bf16.mxu0 0
    %443 = vmatpush1.bf16.msra.mxu0 0
    %444 = vmatprep.subr.bf16.mxu0 0
    %445 = vmatpush1.bf16.msra.mxu0 0
    %446 = vmatprep.subr.bf16.mxu0 0
    %447 = vmatpush1.bf16.msra.mxu0 0
    %448 = vmatprep.subr.bf16.mxu0 0
    %449 = vmatpush1.bf16.msra.mxu0 0
    %450 = vmatprep.subr.bf16.mxu0 0
    %451 = vmatpush1.bf16.msra.mxu0 0
    %452 = vmatprep.subr.bf16.mxu0 0
    %453 = vmatpush1.bf16.msra.mxu0 0
    %454 = vmatprep.subr.bf16.mxu0 0
    %455 = vmatpush1.bf16.msra.mxu0 0
    %456 = vmatprep.subr.bf16.mxu0 0
    %457 = vmatpush1.bf16.msra.mxu0 0
    %458 = vmatprep.subr.bf16.mxu0 0
    %459 = vmatpush1.bf16.msra.mxu0 0
    %460 = vmatprep.mubr.bf16.mxu0 0
    %461 = vmatmul.mubr.bf16.gmra.mrb[0].mxu0 %v426
    %v462 = vpop.f32.mrb[0].mxu0
    %v463 = vadd.f32 0.0, %v462
    %v464 = vpop.f32.mrb[0].mxu0
    %v465 = vpop.f32.mrb[0].mxu0
    %v466 = vpop.f32.mrb[0].mxu0
    %467 = vdwg.mxu0
    %v469 = vrot.slane %v463, 3
    %v471 = vadd.f32 %v63, %v469
    %v472 = vxor.u32 %v471, 2147483648
    %v473 = vmul.f32 %v472, 1.442695
    %v474 = vpow.pop %v473
    %v475 = vadd.f32 %v474, 1.0
    %v476 = vrcp.pop %v475
    %v477 = vmul.f32 1.0, %v476
    %v478 = vtanh.pop %v471
    %v480 = vrot.slane %v413, 7
    %v482 = vmul.f32 %v477, %v480
    %484 = vrot.lane.b32.xlu0 %v478, 32
    %v485 = vpop.permute.xlu0 %484
    %v487 = vmul.f32 %v477, %v485
    %489 = vrot.lane.b32.xlu0 %v487, 32
    %v490 = vpop.permute.xlu0 %489
    %v492 = vadd.f32 %v482, %v490
    %v493 = vtanh.pop %v492
    %495 = vrot.lane.b32.xlu0 %v493, 32
    %v496 = vpop.permute.xlu0 %495
    %v498 = vmul.f32 %v477, %v496
    %v499 = vpack.c.bf16 %v498, %v498
    %v501 = vshrl.u32 %v499, 16
    %v503 = vrot.slane %v501, 2
    %504 = vrot.lane.b32.xlu0 %v503, 64
    %v505 = vpop.permute.xlu0 %504
    %v507 = vsel %vm103, %v505, 0
    %509 = vmatprep.subr.bf16.mxu0 0
    %510 = vmatpush1.bf16.msra.mxu0 %v99
    %511 = vmatprep.subr.bf16.mxu0 0
    %512 = vmatpush1.bf16.msra.mxu0 %v100
    %513 = vmatprep.subr.bf16.mxu0 0
    %514 = vmatpush1.bf16.msra.mxu0 0
    %515 = vmatprep.subr.bf16.mxu0 0
    %516 = vmatpush1.bf16.msra.mxu0 0
    %517 = vmatprep.subr.bf16.mxu0 0
    %518 = vmatpush1.bf16.msra.mxu0 0
    %519 = vmatprep.subr.bf16.mxu0 0
    %520 = vmatpush1.bf16.msra.mxu0 0
    %521 = vmatprep.subr.bf16.mxu0 0
    %522 = vmatpush1.bf16.msra.mxu0 0
    %523 = vmatprep.subr.bf16.mxu0 0
    %524 = vmatpush1.bf16.msra.mxu0 0
    %525 = vmatprep.subr.bf16.mxu0 0
    %526 = vmatpush1.bf16.msra.mxu0 0
    %527 = vmatprep.subr.bf16.mxu0 0
    %528 = vmatpush1.bf16.msra.mxu0 0
    %529 = vmatprep.subr.bf16.mxu0 0
    %530 = vmatpush1.bf16.msra.mxu0 0
    %531 = vmatprep.subr.bf16.mxu0 0
    %532 = vmatpush1.bf16.msra.mxu0 0
    %533 = vmatprep.subr.bf16.mxu0 0
    %534 = vmatpush1.bf16.msra.mxu0 0
    %535 = vmatprep.subr.bf16.mxu0 0
    %536 = vmatpush1.bf16.msra.mxu0 0
    %537 = vmatprep.subr.bf16.mxu0 0
    %538 = vmatpush1.bf16.msra.mxu0 0
    %539 = vmatprep.subr.bf16.mxu0 0
    %540 = vmatpush1.bf16.msra.mxu0 0
    %541 = vmatprep.mubr.bf16.mxu0 0
    %542 = vmatmul.mubr.bf16.gmra.mrb[0].mxu0 %v507
    %v543 = vpop.f32.mrb[0].mxu0
    %v544 = vadd.f32 0.0, %v543
    %v545 = vpop.f32.mrb[0].mxu0
    %v546 = vpop.f32.mrb[0].mxu0
    %v547 = vpop.f32.mrb[0].mxu0
    %548 = vdwg.mxu0
    %v550 = vrot.slane %v544, 2
    %v552 = vadd.f32 %v63, %v550
    %v553 = vxor.u32 %v552, 2147483648
    %v554 = vmul.f32 %v553, 1.442695
    %v555 = vpow.pop %v554
    %v556 = vadd.f32 %v555, 1.0
    %v557 = vrcp.pop %v556
    %v558 = vmul.f32 1.0, %v557
    %v559 = vtanh.pop %v552
    %v561 = vrot.slane %v492, 7
    %v563 = vmul.f32 %v558, %v561
    %565 = vrot.lane.b32.xlu0 %v559, 32
    %v566 = vpop.permute.xlu0 %565
    %v568 = vmul.f32 %v558, %v566
    %570 = vrot.lane.b32.xlu0 %v568, 32
    %v571 = vpop.permute.xlu0 %570
    %v573 = vadd.f32 %v563, %v571
    %v574 = vtanh.pop %v573
    %576 = vrot.lane.b32.xlu0 %v574, 32
    %v577 = vpop.permute.xlu0 %576
    %v579 = vmul.f32 %v558, %v577
    %v580 = vpack.c.bf16 %v579, %v579
    %v582 = vrot.slane %v580, 3
    %583 = vrot.lane.b32.xlu0 %v582, 64
    %v584 = vpop.permute.xlu0 %583
    %v586 = vsel %vm103, %v584, 0
    %588 = vmatprep.subr.bf16.mxu0 0
    %589 = vmatpush1.bf16.msra.mxu0 %v99
    %590 = vmatprep.subr.bf16.mxu0 0
    %591 = vmatpush1.bf16.msra.mxu0 %v100
    %592 = vmatprep.subr.bf16.mxu0 0
    %593 = vmatpush1.bf16.msra.mxu0 0
    %594 = vmatprep.subr.bf16.mxu0 0
    %595 = vmatpush1.bf16.msra.mxu0 0
    %596 = vmatprep.subr.bf16.mxu0 0
    %597 = vmatpush1.bf16.msra.mxu0 0
    %598 = vmatprep.subr.bf16.mxu0 0
    %599 = vmatpush1.bf16.msra.mxu0 0
    %600 = vmatprep.subr.bf16.mxu0 0
    %601 = vmatpush1.bf16.msra.mxu0 0
    %602 = vmatprep.subr.bf16.mxu0 0
    %603 = vmatpush1.bf16.msra.mxu0 0
    %604 = vmatprep.subr.bf16.mxu0 0
    %605 = vmatpush1.bf16.msra.mxu0 0
    %606 = vmatprep.subr.bf16.mxu0 0
    %607 = vmatpush1.bf16.msra.mxu0 0
    %608 = vmatprep.subr.bf16.mxu0 0
    %609 = vmatpush1.bf16.msra.mxu0 0
    %610 = vmatprep.subr.bf16.mxu0 0
    %611 = vmatpush1.bf16.msra.mxu0 0
    %612 = vmatprep.subr.bf16.mxu0 0
    %613 = vmatpush1.bf16.msra.mxu0 0
    %614 = vmatprep.subr.bf16.mxu0 0
    %615 = vmatpush1.bf16.msra.mxu0 0
    %616 = vmatprep.subr.bf16.mxu0 0
    %617 = vmatpush1.bf16.msra.mxu0 0
    %618 = vmatprep.subr.bf16.mxu0 0
    %619 = vmatpush1.bf16.msra.mxu0 0
    %620 = vmatprep.mubr.bf16.mxu0 0
    %621 = vmatmul.mubr.bf16.gmra.mrb[0].mxu0 %v586
    %v622 = vpop.f32.mrb[0].mxu0
    %v623 = vadd.f32 0.0, %v622
    %v624 = vpop.f32.mrb[0].mxu0
    %v625 = vpop.f32.mrb[0].mxu0
    %v626 = vpop.f32.mrb[0].mxu0
    %627 = vdwg.mxu0
    %v629 = vrot.slane %v623, 1
    %v631 = vadd.f32 %v63, %v629
    %v632 = vxor.u32 %v631, 2147483648
    %v633 = vmul.f32 %v632, 1.442695
    %v634 = vpow.pop %v633
    %v635 = vadd.f32 %v634, 1.0
    %v636 = vrcp.pop %v635
    %v637 = vmul.f32 1.0, %v636
    %v638 = vtanh.pop %v631
    %v640 = vrot.slane %v573, 7
    %v642 = vmul.f32 %v637, %v640
    %644 = vrot.lane.b32.xlu0 %v638, 32
    %v645 = vpop.permute.xlu0 %644
    %v647 = vmul.f32 %v637, %v645
    %649 = vrot.lane.b32.xlu0 %v647, 32
    %v650 = vpop.permute.xlu0 %649
    %v652 = vadd.f32 %v642, %v650
    %v653 = vtanh.pop %v652
    %655 = vrot.lane.b32.xlu0 %v653, 32
    %v656 = vpop.permute.xlu0 %655
    %v658 = vmul.f32 %v637, %v656
    %v659 = vxor.u32 %v64, 2147483648
    %v660 = vmul.f32 %v659, 1.442695
    %v661 = vpow.pop %v660
    %v662 = vadd.f32 %v661, 1.0
    %v663 = vrcp.pop %v662
    %v664 = vmul.f32 1.0, %v663
    %v665 = vtanh.pop %v64
    %667 = vrot.lane.b32.xlu0 %v665, 32
    %v668 = vpop.permute.xlu0 %667
    %v670 = vmul.f32 %v664, %v668
    %v671 = vtanh.pop %v670
    %673 = vrot.lane.b32.xlu0 %v671, 64
    %v674 = vpop.permute.xlu0 %673
    %v676 = vmul.f32 %v664, %v674
    %v678 = vlaneseq
    %v679 = vshrl.u32 %v678, 7
    %v680 = vsub.s32 0, %v679
    %v681 = vrot.slane %v32, %v680
    %682 = vrot.lane.b32.xlu0 %v681, 64
    %v683 = vpop.permute.xlu0 %682
    %v685 = vmul.f32 %v658, %v683
    %687 = vrot.lane.b32.xlu0 %v685, 64
    %v688 = vpop.permute.xlu0 %687
    %vm690 = vcmask 261127
    %v691 = vsel %vm690, %v688, 0.0
    %692 = vadd.xlane.f32.xlu0 %v691
    %v693 = vpop.xlane.xlu0 %692
    %694 = vrot.lane.b32.xlu0 %v681, 32
    %v695 = vpop.permute.xlu0 %694
    %v697 = vmul.f32 %v676, %v695
    %699 = vrot.lane.b32.xlu0 %v697, 64
    %v700 = vpop.permute.xlu0 %699
    %v702 = vsel %vm690, %v700, 0.0
    %703 = vadd.xlane.f32.xlu0 %v702
    %v704 = vpop.xlane.xlu0 %703
    %v705 = vadd.f32 %v693, %v704
    %v706 = vadd.f32 %v705, %v683
    %vm707 = vcmask 7175
    %708 = vst.msk [vmem:[#allocation5 - $0x7] sm:$0x80] %vm707, %v706
    // Predicated region
    $region18: #{tpu_custom_call.1} parent=1 // pred_check
      _
    $region19: #{tpu_custom_call.1} parent=1 // pred_check_branch
      %710 = sbr.rel (0) target = $region21
    $region20: #{tpu_custom_call.1} parent=1 // pred_region
      %s712 = ssub.s32 16, 16
      %713 = vsyncadd [#allocation4], %s712
      %s715 = sshll.u32 [#allocation5], 4
      %s716 = int_to_ptr.vmem [resolvable:$true] %s715
      %718 = dma.vmem_to_hbm [thread:$0]  %s716, 16, %s3, [#allocation4]
    $region21: #{tpu_custom_call.1} parent=1 // pred_fallthru
      _
    // Predicated region
    $region22: #{tpu_custom_call.1} parent=1 // pred_check
      _
    $region23: #{tpu_custom_call.1} parent=1 // pred_check_branch
      %720 = sbr.rel (0) target = $region25
    $region24: #{tpu_custom_call.1} parent=1 // pred_region
      %721 = dma.done [#allocation4], 16
    $region25: #{tpu_custom_call.1} parent=1 // pred_fallthru
      _
    %722 = vsyncpa [#allocation3], 1
    %723 = vsyncpa [#allocation4], 1

</llo_original>
